<compile_context>
chip_gen: v6e
topology: v6e:2x2x1
jax: 0.10.0
libtpu: 0.0.40
codegen_flags: <defaults>
</compile_context>

<pallas_src>
import functools

import jax
import jax.numpy as jnp
from jax.experimental import pallas as pl
from jax.experimental.pallas import tpu as pltpu

_EPS = 1e-12                        # same eps as torch.nn.functional.normalize
_TARGET_BLOCK_BYTES = 2 * 1024 * 1024   # per-grid-step input bytes (all S refs)
_FUSE_BYTES = 4 * 1024 * 1024           # fuse min+power when total fits in VMEM
_VMEM_LIMIT = 32 * 1024 * 1024          # safe on v5e/v6e/v7x


def _pick_b_tile(S, B, D, itemsize):
    """Largest B tile (multiple of 8, divides B) keeping the per-step input
    block (across all S refs) under _TARGET_BLOCK_BYTES."""
    total = S * B * D * itemsize
    if total <= _TARGET_BLOCK_BYTES or B % 8 != 0:
        return B
    candidates = [t for t in range(8, B + 1, 8)
                  if B % t == 0 and S * t * D * itemsize <= _TARGET_BLOCK_BYTES]
    return max(candidates) if candidates else 8


def _pow_static(x, ps):
    """x ** ps via an integer multiply chain (VPU) when ps is a positive
    integer; falls back to jnp.power (EUP log+exp) otherwise."""
    if float(ps).is_integer() and ps >= 1:
        n = int(ps)
        result = None
        base = x
        while True:
            if n & 1:
                result = base if result is None else result * base
            n >>= 1
            if n == 0:
                break
            base = base * base
        return result
    return jnp.power(x, ps)


# ---------------------------------------------------------------------------
# infinity=True branch: L2-normalize along last dim, max over the S refs.
# ---------------------------------------------------------------------------
def _sgem_inf_kernel(*refs):
    x_refs = refs[:-1]
    o_ref = refs[-1]
    acc = None
    for x_ref in x_refs:                       # static loop over the S inputs
        x = x_ref[...].astype(jnp.float32)
        sumsq = jnp.sum(x * x, axis=-1, keepdims=True)
        inv = jax.lax.rsqrt(jnp.maximum(sumsq, _EPS * _EPS))  # 1/max(||x||,eps)
        xn = x * inv
        acc = xn if acc is None else jnp.maximum(acc, xn)
    o_ref[...] = acc.astype(o_ref.dtype)


def _sgem_infinity(xs, b_tile=None):
    S = len(xs)
    B, D = xs[0].shape
    itemsize = jnp.dtype(xs[0].dtype).itemsize
    if b_tile is None:
        b_tile = _pick_b_tile(S, B, D, itemsize)
    assert B % b_tile == 0
    nb = B // b_tile
    return pl.pallas_call(
        _sgem_inf_kernel,
        out_shape=jax.ShapeDtypeStruct((B, D), xs[0].dtype),
        grid_spec=pltpu.PrefetchScalarGridSpec(
            num_scalar_prefetch=0,
            grid=(nb,),
            in_specs=[pl.BlockSpec((b_tile, D), lambda i: (i, 0))
                      for _ in range(S)],
            out_specs=pl.BlockSpec((b_tile, D), lambda i: (i, 0)),
        ),
        compiler_params=pltpu.CompilerParams(
            dimension_semantics=("parallel",),
            vmem_limit_bytes=_VMEM_LIMIT),
    )(*xs)


# ---------------------------------------------------------------------------
# infinity=False branch.
# Fused single-pass kernel (fits in VMEM) or two-pass (global-min + power).
# ---------------------------------------------------------------------------
def _sgem_pow_fused_kernel(*refs, ps):
    x_refs = refs[:-1]
    o_ref = refs[-1]
    xs = [r[...].astype(jnp.float32) for r in x_refs]
    gmin = jnp.min(xs[0])
    for x in xs[1:]:
        gmin = jnp.minimum(gmin, jnp.min(x))
    acc = None
    for x in xs:
        t = _pow_static(x - gmin, ps)
        acc = t if acc is None else acc + t
    mean = acc * (1.0 / len(xs))
    o_ref[...] = (jnp.power(mean, 1.0 / ps) + gmin).astype(o_ref.dtype)


def _power_fused(xs, ps):
    S = len(xs)
    B, D = xs[0].shape
    return pl.pallas_call(
        functools.partial(_sgem_pow_fused_kernel, ps=ps),
        out_shape=jax.ShapeDtypeStruct((B, D), xs[0].dtype),
        grid_spec=pltpu.PrefetchScalarGridSpec(
            num_scalar_prefetch=0,
            grid=(1,),
            in_specs=[pl.BlockSpec((B, D), lambda i: (0, 0))
                      for _ in range(S)],
            out_specs=pl.BlockSpec((B, D), lambda i: (0, 0)),
        ),
        compiler_params=pltpu.CompilerParams(
            dimension_semantics=("arbitrary",),
            vmem_limit_bytes=_VMEM_LIMIT),
    )(*xs)


def _global_min_kernel(*refs):
    x_refs = refs[:-2]
    gmin_ref = refs[-2]      # (1, 1) SMEM output
    part_ref = refs[-1]      # (b_tile, D) VMEM partial-min scratch
    i = pl.program_id(0)

    blk = x_refs[0][...].astype(jnp.float32)
    for r in x_refs[1:]:
        blk = jnp.minimum(blk, r[...].astype(jnp.float32))

    @pl.when(i == 0)
    def _():
        part_ref[...] = blk

    @pl.when(i > 0)
    def _():
        part_ref[...] = jnp.minimum(part_ref[...], blk)

    @pl.when(i == pl.num_programs(0) - 1)
    def _():
        gmin_ref[0, 0] = jnp.min(part_ref[...])   # single cross-lane reduce


def _global_min(xs, b_tile):
    S = len(xs)
    B, D = xs[0].shape
    nb = B // b_tile
    return pl.pallas_call(
        _global_min_kernel,
        out_shape=jax.ShapeDtypeStruct((1, 1), jnp.float32),
        grid_spec=pltpu.PrefetchScalarGridSpec(
            num_scalar_prefetch=0,
            grid=(nb,),
            in_specs=[pl.BlockSpec((b_tile, D), lambda i: (i, 0))
                      for _ in range(S)],
            out_specs=pl.BlockSpec(memory_space=pltpu.SMEM),
            scratch_shapes=[pltpu.VMEM((b_tile, D), jnp.float32)],
        ),
        compiler_params=pltpu.CompilerParams(
            dimension_semantics=("arbitrary",),
            vmem_limit_bytes=_VMEM_LIMIT),
    )(*xs)


def _sgem_pow_kernel(gamma_ref, *refs, ps):
    x_refs = refs[:-1]
    o_ref = refs[-1]
    gamma = gamma_ref[0, 0]
    acc = None
    for r in x_refs:
        t = _pow_static(r[...].astype(jnp.float32) - gamma, ps)
        acc = t if acc is None else acc + t
    mean = acc * (1.0 / len(x_refs))
    o_ref[...] = (jnp.power(mean, 1.0 / ps) + gamma).astype(o_ref.dtype)


def _power_tiled(xs, gamma, ps, b_tile):
    S = len(xs)
    B, D = xs[0].shape
    nb = B // b_tile
    return pl.pallas_call(
        functools.partial(_sgem_pow_kernel, ps=ps),
        out_shape=jax.ShapeDtypeStruct((B, D), xs[0].dtype),
        grid_spec=pltpu.PrefetchScalarGridSpec(
            num_scalar_prefetch=0,
            grid=(nb,),
            in_specs=[pl.BlockSpec(memory_space=pltpu.SMEM)]       # gamma (1,1)
                     + [pl.BlockSpec((b_tile, D), lambda i: (i, 0))
                        for _ in range(S)],
            out_specs=pl.BlockSpec((b_tile, D), lambda i: (i, 0)),
        ),
        compiler_params=pltpu.CompilerParams(
            dimension_semantics=("parallel",),
            vmem_limit_bytes=_VMEM_LIMIT),
    )(gamma, *xs)


def _sgem_power_mean(xs, ps, b_tile=None):
    S = len(xs)
    B, D = xs[0].shape
    itemsize = jnp.dtype(xs[0].dtype).itemsize
    if b_tile is None:
        b_tile = _pick_b_tile(S, B, D, itemsize)
    assert B % b_tile == 0
    total_f32 = S * B * D * 4
    if b_tile == B and total_f32 <= _FUSE_BYTES:
        return _power_fused(xs, ps)             # single HBM pass
    gamma = _global_min(xs, b_tile)             # pass 1: scalar global min
    return _power_tiled(xs, gamma, ps, b_tile)  # pass 2: power mean


# ---------------------------------------------------------------------------
# Public wrapper mirroring sgem.forward (takes a list of (B, D) arrays).
# ---------------------------------------------------------------------------
def sgem(xs, ps=10.0, infinity=True, *, b_tile=None):
    # Note: the list elements are fed to the kernel as separate inputs, so no
    # stacked (S, B, D) copy is ever written to HBM.
    if infinity:
        return _sgem_infinity(xs, b_tile=b_tile)
    return _sgem_power_mean(xs, ps, b_tile=b_tile)


# Pure-JAX reference (matches the PyTorch module).
def sgem_ref(xs, ps=10.0, infinity=True):
    x = jnp.stack(xs, 0)
    if infinity:
        nrm = jnp.sqrt(jnp.sum(x * x, axis=-1, keepdims=True))
        x = x / jnp.maximum(nrm, _EPS)
        return jnp.max(x, axis=0)
    gamma = jnp.min(x)
    return jnp.power(jnp.mean(jnp.power(x - gamma, ps), axis=0), 1.0 / ps) + gamma


if __name__ == "__main__":
    key = jax.random.PRNGKey(0)
    S, B, D = 6, 16, 128  # stack length, batch, feature dim
    keys = jax.random.split(key, S)
    xs = [jax.random.normal(k, (B, D), dtype=jnp.float32) for k in keys]

    ref_inf = sgem_ref(xs, infinity=True)
    ref_pow = sgem_ref(xs, ps=10.0, infinity=False)

    # Default auto-tiled paths (single B tile; fused power kernel).
    out_inf = jax.block_until_ready(sgem(xs, infinity=True))
    assert out_inf.shape == (B, D)
    assert jnp.allclose(out_inf, ref_inf, atol=1e-5, rtol=1e-5), "infinity branch mismatch"

    out_pow = jax.block_until_ready(sgem(xs, ps=10.0, infinity=False))
    assert out_pow.shape == (B, D)
    assert jnp.allclose(out_pow, ref_pow, atol=1e-3, rtol=1e-3), "power-mean branch mismatch"

    # Explicit B tiling (grid > 1): exercises the parallel B-tile grid and the
    # two-pass (global-min + power-mean) path.
    out_inf_t = jax.block_until_ready(sgem(xs, infinity=True, b_tile=8))
    assert jnp.allclose(out_inf_t, ref_inf, atol=1e-5, rtol=1e-5), "tiled infinity mismatch"

    out_pow_t = jax.block_until_ready(sgem(xs, ps=10.0, infinity=False, b_tile=8))
    assert jnp.allclose(out_pow_t, ref_pow, atol=1e-3, rtol=1e-3), "tiled power-mean mismatch"

    print("KERNEL_OK")
</pallas_src>

<mosaic_0001>
module attributes {stable_mosaic.version = 11 : i64} {
  func.func @_sgem_inf_kernel(%arg0: i32, %arg1: memref<16x128xf32, #tpu.memory_space<vmem>>, %arg2: memref<16x128xf32, #tpu.memory_space<vmem>>, %arg3: memref<16x128xf32, #tpu.memory_space<vmem>>, %arg4: memref<16x128xf32, #tpu.memory_space<vmem>>, %arg5: memref<16x128xf32, #tpu.memory_space<vmem>>, %arg6: memref<16x128xf32, #tpu.memory_space<vmem>>, %arg7: memref<16x128xf32, #tpu.memory_space<vmem>>) attributes {dimension_semantics = [#tpu.dimension_semantics<parallel>], iteration_bounds = array<i64: 1>, scalar_prefetch = 0 : i64, scratch_operands = 0 : i64, tpu.core_type = #tpu.core_type<tc>, window_params = [{transform_indices = @transform_0, window_bounds = array<i64: 16, 128>}, {transform_indices = @transform_1, window_bounds = array<i64: 16, 128>}, {transform_indices = @transform_2, window_bounds = array<i64: 16, 128>}, {transform_indices = @transform_3, window_bounds = array<i64: 16, 128>}, {transform_indices = @transform_4, window_bounds = array<i64: 16, 128>}, {transform_indices = @transform_5, window_bounds = array<i64: 16, 128>}, {transform_indices = @transform_6, window_bounds = array<i64: 16, 128>}]} {
    %c0 = arith.constant 0 : index
    %c0_0 = arith.constant 0 : index
    %0 = vector.load %arg1[%c0, %c0_0] : memref<16x128xf32, #tpu.memory_space<vmem>>, vector<16x128xf32>
    %1 = arith.mulf %0, %0 : vector<16x128xf32>
    %cst = arith.constant dense<0.000000e+00> : vector<16xf32>
    %2 = vector.multi_reduction <add>, %1, %cst [1] : vector<16x128xf32> to vector<16xf32>
    %3 = vector.shape_cast %2 : vector<16xf32> to vector<16x1xf32>
    %cst_1 = arith.constant 1.000000e-24 : f32
    %4 = vector.broadcast %cst_1 : f32 to vector<16x1xf32>
    %5 = arith.maximumf %3, %4 : vector<16x1xf32>
    %6 = math.rsqrt %5 : vector<16x1xf32>
    %7 = vector.broadcast %6 : vector<16x1xf32> to vector<16x128xf32>
    %8 = arith.mulf %0, %7 : vector<16x128xf32>
    %c0_2 = arith.constant 0 : index
    %c0_3 = arith.constant 0 : index
    %9 = vector.load %arg2[%c0_2, %c0_3] : memref<16x128xf32, #tpu.memory_space<vmem>>, vector<16x128xf32>
    %10 = arith.mulf %9, %9 : vector<16x128xf32>
    %cst_4 = arith.constant dense<0.000000e+00> : vector<16xf32>
    %11 = vector.multi_reduction <add>, %10, %cst_4 [1] : vector<16x128xf32> to vector<16xf32>
    %12 = vector.shape_cast %11 : vector<16xf32> to vector<16x1xf32>
    %cst_5 = arith.constant 1.000000e-24 : f32
    %13 = vector.broadcast %cst_5 : f32 to vector<16x1xf32>
    %14 = arith.maximumf %12, %13 : vector<16x1xf32>
    %15 = math.rsqrt %14 : vector<16x1xf32>
    %16 = vector.broadcast %15 : vector<16x1xf32> to vector<16x128xf32>
    %17 = arith.mulf %9, %16 : vector<16x128xf32>
    %18 = arith.maximumf %8, %17 : vector<16x128xf32>
    %c0_6 = arith.constant 0 : index
    %c0_7 = arith.constant 0 : index
    %19 = vector.load %arg3[%c0_6, %c0_7] : memref<16x128xf32, #tpu.memory_space<vmem>>, vector<16x128xf32>
    %20 = arith.mulf %19, %19 : vector<16x128xf32>
    %cst_8 = arith.constant dense<0.000000e+00> : vector<16xf32>
    %21 = vector.multi_reduction <add>, %20, %cst_8 [1] : vector<16x128xf32> to vector<16xf32>
    %22 = vector.shape_cast %21 : vector<16xf32> to vector<16x1xf32>
    %cst_9 = arith.constant 1.000000e-24 : f32
    %23 = vector.broadcast %cst_9 : f32 to vector<16x1xf32>
    %24 = arith.maximumf %22, %23 : vector<16x1xf32>
    %25 = math.rsqrt %24 : vector<16x1xf32>
    %26 = vector.broadcast %25 : vector<16x1xf32> to vector<16x128xf32>
    %27 = arith.mulf %19, %26 : vector<16x128xf32>
    %28 = arith.maximumf %18, %27 : vector<16x128xf32>
    %c0_10 = arith.constant 0 : index
    %c0_11 = arith.constant 0 : index
    %29 = vector.load %arg4[%c0_10, %c0_11] : memref<16x128xf32, #tpu.memory_space<vmem>>, vector<16x128xf32>
    %30 = arith.mulf %29, %29 : vector<16x128xf32>
    %cst_12 = arith.constant dense<0.000000e+00> : vector<16xf32>
    %31 = vector.multi_reduction <add>, %30, %cst_12 [1] : vector<16x128xf32> to vector<16xf32>
    %32 = vector.shape_cast %31 : vector<16xf32> to vector<16x1xf32>
    %cst_13 = arith.constant 1.000000e-24 : f32
    %33 = vector.broadcast %cst_13 : f32 to vector<16x1xf32>
    %34 = arith.maximumf %32, %33 : vector<16x1xf32>
    %35 = math.rsqrt %34 : vector<16x1xf32>
    %36 = vector.broadcast %35 : vector<16x1xf32> to vector<16x128xf32>
    %37 = arith.mulf %29, %36 : vector<16x128xf32>
    %38 = arith.maximumf %28, %37 : vector<16x128xf32>
    %c0_14 = arith.constant 0 : index
    %c0_15 = arith.constant 0 : index
    %39 = vector.load %arg5[%c0_14, %c0_15] : memref<16x128xf32, #tpu.memory_space<vmem>>, vector<16x128xf32>
    %40 = arith.mulf %39, %39 : vector<16x128xf32>
    %cst_16 = arith.constant dense<0.000000e+00> : vector<16xf32>
    %41 = vector.multi_reduction <add>, %40, %cst_16 [1] : vector<16x128xf32> to vector<16xf32>
    %42 = vector.shape_cast %41 : vector<16xf32> to vector<16x1xf32>
    %cst_17 = arith.constant 1.000000e-24 : f32
    %43 = vector.broadcast %cst_17 : f32 to vector<16x1xf32>
    %44 = arith.maximumf %42, %43 : vector<16x1xf32>
    %45 = math.rsqrt %44 : vector<16x1xf32>
    %46 = vector.broadcast %45 : vector<16x1xf32> to vector<16x128xf32>
    %47 = arith.mulf %39, %46 : vector<16x128xf32>
    %48 = arith.maximumf %38, %47 : vector<16x128xf32>
    %c0_18 = arith.constant 0 : index
    %c0_19 = arith.constant 0 : index
    %49 = vector.load %arg6[%c0_18, %c0_19] : memref<16x128xf32, #tpu.memory_space<vmem>>, vector<16x128xf32>
    %50 = arith.mulf %49, %49 : vector<16x128xf32>
    %cst_20 = arith.constant dense<0.000000e+00> : vector<16xf32>
    %51 = vector.multi_reduction <add>, %50, %cst_20 [1] : vector<16x128xf32> to vector<16xf32>
    %52 = vector.shape_cast %51 : vector<16xf32> to vector<16x1xf32>
    %cst_21 = arith.constant 1.000000e-24 : f32
    %53 = vector.broadcast %cst_21 : f32 to vector<16x1xf32>
    %54 = arith.maximumf %52, %53 : vector<16x1xf32>
    %55 = math.rsqrt %54 : vector<16x1xf32>
    %56 = vector.broadcast %55 : vector<16x1xf32> to vector<16x128xf32>
    %57 = arith.mulf %49, %56 : vector<16x128xf32>
    %58 = arith.maximumf %48, %57 : vector<16x128xf32>
    %c0_22 = arith.constant 0 : index
    %c0_23 = arith.constant 0 : index
    %59 = vector.load %arg7[%c0_22, %c0_23] : memref<16x128xf32, #tpu.memory_space<vmem>>, vector<16x128xf32>
    tpu.vector_store %arg7[%c0_22, %c0_23], %58 {strides = array<i32>} : memref<16x128xf32, #tpu.memory_space<vmem>>, vector<16x128xf32>,
    return
  }
  func.func @transform_0(%arg0: i32) -> (i32, i32) {
    %c0_i32 = arith.constant 0 : i32
    %c0_i32_0 = arith.constant 0 : i32
    return %arg0, %c0_i32 : i32, i32
  }
  func.func @transform_1(%arg0: i32) -> (i32, i32) {
    %c0_i32 = arith.constant 0 : i32
    %c0_i32_0 = arith.constant 0 : i32
    return %arg0, %c0_i32 : i32, i32
  }
  func.func @transform_2(%arg0: i32) -> (i32, i32) {
    %c0_i32 = arith.constant 0 : i32
    %c0_i32_0 = arith.constant 0 : i32
    return %arg0, %c0_i32 : i32, i32
  }
  func.func @transform_3(%arg0: i32) -> (i32, i32) {
    %c0_i32 = arith.constant 0 : i32
    %c0_i32_0 = arith.constant 0 : i32
    return %arg0, %c0_i32 : i32, i32
  }
  func.func @transform_4(%arg0: i32) -> (i32, i32) {
    %c0_i32 = arith.constant 0 : i32
    %c0_i32_0 = arith.constant 0 : i32
    return %arg0, %c0_i32 : i32, i32
  }
  func.func @transform_5(%arg0: i32) -> (i32, i32) {
    %c0_i32 = arith.constant 0 : i32
    %c0_i32_0 = arith.constant 0 : i32
    return %arg0, %c0_i32 : i32, i32
  }
  func.func @transform_6(%arg0: i32) -> (i32, i32) {
    %c0_i32 = arith.constant 0 : i32
    %c0_i32_0 = arith.constant 0 : i32
    return %arg0, %c0_i32 : i32, i32
  }
}

</mosaic_0001>

<llo_original>
// kernel: tpu_custom_call.1
$region0: #{tpu_custom_call.1}
  #allocation0 [shape = 'u32[]', space=smem, size = 0x4, offset = 0x4, fixed_abs, tag = 'smem constant byte address 0x4 - core index']
  #allocation1 [shape = 'u32[144,128]{1,0:T(1,128)}', space=vmem, size = 0x12000, scoped, tag = 'internal scratch']
  %s0 = inlined_call_operand.hbm [shape: f32[16,128], index: 0, kind: input, shape index: {}]
  %s1 = inlined_call_operand.hbm [shape: f32[16,128], index: 1, kind: input, shape index: {}]
  %s2 = inlined_call_operand.hbm [shape: f32[16,128], index: 2, kind: input, shape index: {}]
  %s3 = inlined_call_operand.hbm [shape: f32[16,128], index: 3, kind: input, shape index: {}]
  %s4 = inlined_call_operand.hbm [shape: f32[16,128], index: 4, kind: input, shape index: {}]
  %s5 = inlined_call_operand.hbm [shape: f32[16,128], index: 5, kind: input, shape index: {}]
  %s6 = inlined_call_operand.hbm [shape: f32[16,128], index: 6, kind: output, shape index: {}]
  %s7 = sld [smem:[#allocation0]]
  $region58: #{tpu_custom_call.1} parent=0
    _
  %s9 = ssub.s32 1, %s7
  %s10 = scalar_select 0, %s9, %s7
  $region1: #{tpu_custom_call.1} parent=0
    #allocation2 [shape = 'u8[8192]{0}', space=vmem, size = 0x2000, scoped, tag = 'input window, operand 0, single buffered']
    #allocation3 [shape = 's32[1]{0}', space=sflag, size = 0x4, scoped, tag = 'scoped memory for tpu_custom_call.1']
    #allocation4 [shape = 's32[1]{0}', space=sflag, size = 0x4, scoped, tag = 'scoped memory for tpu_custom_call.1']
    #allocation5 [shape = 'u8[8192]{0}', space=vmem, size = 0x2000, scoped, tag = 'input window, operand 1, single buffered']
    #allocation6 [shape = 's32[1]{0}', space=sflag, size = 0x4, scoped, tag = 'scoped memory for tpu_custom_call.1']
    #allocation7 [shape = 'u8[8192]{0}', space=vmem, size = 0x2000, scoped, tag = 'input window, operand 2, single buffered']
    #allocation8 [shape = 'u8[8192]{0}', space=vmem, size = 0x2000, scoped, tag = 'input window, operand 3, single buffered']
    #allocation9 [shape = 's32[1]{0}', space=sflag, size = 0x4, scoped, tag = 'scoped memory for tpu_custom_call.1']
    #allocation10 [shape = 'u8[8192]{0}', space=vmem, size = 0x2000, scoped, tag = 'input window, operand 4, single buffered']
    #allocation11 [shape = 'u8[8192]{0}', space=vmem, size = 0x2000, scoped, tag = 'input window, operand 5, single buffered']
    #allocation12 [shape = 's32[1]{0}', space=sflag, size = 0x4, scoped, tag = 'scoped memory for tpu_custom_call.1']
    #allocation13 [shape = 'u8[8192]{0}', space=vmem, size = 0x2000, scoped, tag = 'output window, operand 0, single buffered']
    %11 = vsyncpa [#allocation3], 0
    %12 = vsyncpa [#allocation6], 0
    %13 = vsyncpa [#allocation9], 0
    %14 = vsyncpa [#allocation12], 0
    %15 = vsyncpa [#allocation4], 0
    // Predicated region
    $region2: #{tpu_custom_call.1} parent=1 // pred_check
      _
    $region3: #{tpu_custom_call.1} parent=1 // pred_check_branch
      %17 = sbr.rel (0) target = $region5
    $region4: #{tpu_custom_call.1} parent=1 // pred_region
      %s19 = ssub.s32 256, 256
      %20 = vsyncadd [#allocation3], %s19
      %s21 = sshll.u32 [#allocation2], 4
      %s22 = int_to_ptr.vmem [resolvable:$true] %s21
      %27 = dma.hbm_to_vmem [thread:$0]  %s0, 256, %s22, [#allocation3], 128, 128, 8
    $region5: #{tpu_custom_call.1} parent=1 // pred_fallthru
      _
    // Predicated region
    $region6: #{tpu_custom_call.1} parent=1 // pred_check
      _
    $region7: #{tpu_custom_call.1} parent=1 // pred_check_branch
      %29 = sbr.rel (0) target = $region9
    $region8: #{tpu_custom_call.1} parent=1 // pred_region
      %s31 = ssub.s32 256, 256
      %32 = vsyncadd [#allocation6], %s31
      %s33 = sshll.u32 [#allocation5], 4
      %s34 = int_to_ptr.vmem [resolvable:$true] %s33
      %39 = dma.hbm_to_vmem [thread:$0]  %s1, 256, %s34, [#allocation6], 128, 128, 8
    $region9: #{tpu_custom_call.1} parent=1 // pred_fallthru
      _
    // Predicated region
    $region10: #{tpu_custom_call.1} parent=1 // pred_check
      _
    $region11: #{tpu_custom_call.1} parent=1 // pred_check_branch
      %41 = sbr.rel (0) target = $region13
    $region12: #{tpu_custom_call.1} parent=1 // pred_region
      %s43 = ssub.s32 256, 256
      %44 = vsyncadd [#allocation6], %s43
      %s45 = sshll.u32 [#allocation7], 4
      %s46 = int_to_ptr.vmem [resolvable:$true] %s45
      %51 = dma.hbm_to_vmem [thread:$0]  %s2, 256, %s46, [#allocation6], 128, 128, 8
    $region13: #{tpu_custom_call.1} parent=1 // pred_fallthru
      _
    // Predicated region
    $region14: #{tpu_custom_call.1} parent=1 // pred_check
      _
    $region15: #{tpu_custom_call.1} parent=1 // pred_check_branch
      %53 = sbr.rel (0) target = $region17
    $region16: #{tpu_custom_call.1} parent=1 // pred_region
      %s55 = ssub.s32 256, 256
      %56 = vsyncadd [#allocation9], %s55
      %s57 = sshll.u32 [#allocation8], 4
      %s58 = int_to_ptr.vmem [resolvable:$true] %s57
      %63 = dma.hbm_to_vmem [thread:$0]  %s3, 256, %s58, [#allocation9], 128, 128, 8
    $region17: #{tpu_custom_call.1} parent=1 // pred_fallthru
      _
    // Predicated region
    $region18: #{tpu_custom_call.1} parent=1 // pred_check
      _
    $region19: #{tpu_custom_call.1} parent=1 // pred_check_branch
      %65 = sbr.rel (0) target = $region21
    $region20: #{tpu_custom_call.1} parent=1 // pred_region
      %s67 = ssub.s32 256, 256
      %68 = vsyncadd [#allocation9], %s67
      %s69 = sshll.u32 [#allocation10], 4
      %s70 = int_to_ptr.vmem [resolvable:$true] %s69
      %75 = dma.hbm_to_vmem [thread:$0]  %s4, 256, %s70, [#allocation9], 128, 128, 8
    $region21: #{tpu_custom_call.1} parent=1 // pred_fallthru
      _
    // Predicated region
    $region22: #{tpu_custom_call.1} parent=1 // pred_check
      _
    $region23: #{tpu_custom_call.1} parent=1 // pred_check_branch
      %77 = sbr.rel (0) target = $region25
    $region24: #{tpu_custom_call.1} parent=1 // pred_region
      %s79 = ssub.s32 256, 256
      %80 = vsyncadd [#allocation12], %s79
      %s81 = sshll.u32 [#allocation11], 4
      %s82 = int_to_ptr.vmem [resolvable:$true] %s81
      %87 = dma.hbm_to_vmem [thread:$0]  %s5, 256, %s82, [#allocation12], 128, 128, 8
    $region25: #{tpu_custom_call.1} parent=1 // pred_fallthru
      _
    // Predicated region
    $region26: #{tpu_custom_call.1} parent=1 // pred_check
      _
    $region27: #{tpu_custom_call.1} parent=1 // pred_check_branch
      %89 = sbr.rel (0) target = $region29
    $region28: #{tpu_custom_call.1} parent=1 // pred_region
      %90 = dma.done [#allocation3], 256
    $region29: #{tpu_custom_call.1} parent=1 // pred_fallthru
      _
    // Predicated region
    $region30: #{tpu_custom_call.1} parent=1 // pred_check
      _
    $region31: #{tpu_custom_call.1} parent=1 // pred_check_branch
      %92 = sbr.rel (0) target = $region33
    $region32: #{tpu_custom_call.1} parent=1 // pred_region
      %93 = dma.done [#allocation6], 256
    $region33: #{tpu_custom_call.1} parent=1 // pred_fallthru
      _
    // Predicated region
    $region34: #{tpu_custom_call.1} parent=1 // pred_check
      _
    $region35: #{tpu_custom_call.1} parent=1 // pred_check_branch
      %95 = sbr.rel (0) target = $region37
    $region36: #{tpu_custom_call.1} parent=1 // pred_region
      %96 = dma.done [#allocation6], 256
    $region37: #{tpu_custom_call.1} parent=1 // pred_fallthru
      _
    // Predicated region
    $region38: #{tpu_custom_call.1} parent=1 // pred_check
      _
    $region39: #{tpu_custom_call.1} parent=1 // pred_check_branch
      %98 = sbr.rel (0) target = $region41
    $region40: #{tpu_custom_call.1} parent=1 // pred_region
      %99 = dma.done [#allocation9], 256
    $region41: #{tpu_custom_call.1} parent=1 // pred_fallthru
      _
    // Predicated region
    $region42: #{tpu_custom_call.1} parent=1 // pred_check
      _
    $region43: #{tpu_custom_call.1} parent=1 // pred_check_branch
      %101 = sbr.rel (0) target = $region45
    $region44: #{tpu_custom_call.1} parent=1 // pred_region
      %102 = dma.done [#allocation9], 256
    $region45: #{tpu_custom_call.1} parent=1 // pred_fallthru
      _
    // Predicated region
    $region46: #{tpu_custom_call.1} parent=1 // pred_check
      _
    $region47: #{tpu_custom_call.1} parent=1 // pred_check_branch
      %104 = sbr.rel (0) target = $region49
    $region48: #{tpu_custom_call.1} parent=1 // pred_region
      %105 = dma.done [#allocation12], 256
    $region49: #{tpu_custom_call.1} parent=1 // pred_fallthru
      _
    %v106 = vld [vmem:[#allocation2] sm:$0xff]
    %v107 = vld [vmem:[#allocation2 + $0x8] sm:$0xff]
    %v108 = vmul.f32 %v106, %v106
    %v109 = vmul.f32 %v107, %v107
    %110 = vadd.xlane.f32.xlu0 %v108
    %v111 = vpop.xlane.xlu0 %110
    %112 = vadd.xlane.f32.xlu0 %v109
    %v113 = vpop.xlane.xlu0 %112
    %v114 = vmax.f32 %v111, 1e-24
    %v115 = vmax.f32 %v113, 1e-24
    %v116 = vrsqrt.pop %v114
    %v117 = vrsqrt.pop %v115
    %v118 = vmul.f32 %v106, %v116
    %v119 = vmul.f32 %v107, %v117
    %v120 = vld [vmem:[#allocation5] sm:$0xff]
    %v121 = vld [vmem:[#allocation5 + $0x8] sm:$0xff]
    %v122 = vmul.f32 %v120, %v120
    %v123 = vmul.f32 %v121, %v121
    %124 = vadd.xlane.f32.xlu0 %v122
    %v125 = vpop.xlane.xlu0 %124
    %126 = vadd.xlane.f32.xlu0 %v123
    %v127 = vpop.xlane.xlu0 %126
    %v128 = vmax.f32 %v125, 1e-24
    %v129 = vmax.f32 %v127, 1e-24
    %v130 = vrsqrt.pop %v128
    %v131 = vrsqrt.pop %v129
    %v132 = vmul.f32 %v120, %v130
    %v133 = vmul.f32 %v121, %v131
    %v134 = vmax.f32 %v118, %v132
    %v135 = vmax.f32 %v119, %v133
    %v136 = vld [vmem:[#allocation7] sm:$0xff]
    %v137 = vld [vmem:[#allocation7 + $0x8] sm:$0xff]
    %v138 = vmul.f32 %v136, %v136
    %v139 = vmul.f32 %v137, %v137
    %140 = vadd.xlane.f32.xlu0 %v138
    %v141 = vpop.xlane.xlu0 %140
    %142 = vadd.xlane.f32.xlu0 %v139
    %v143 = vpop.xlane.xlu0 %142
    %v144 = vmax.f32 %v141, 1e-24
    %v145 = vmax.f32 %v143, 1e-24
    %v146 = vrsqrt.pop %v144
    %v147 = vrsqrt.pop %v145
    %v148 = vmul.f32 %v136, %v146
    %v149 = vmul.f32 %v137, %v147
    %v150 = vmax.f32 %v134, %v148
    %v151 = vmax.f32 %v135, %v149
    %v152 = vld [vmem:[#allocation8] sm:$0xff]
    %v153 = vld [vmem:[#allocation8 + $0x8] sm:$0xff]
    %v154 = vmul.f32 %v152, %v152
    %v155 = vmul.f32 %v153, %v153
    %156 = vadd.xlane.f32.xlu0 %v154
    %v157 = vpop.xlane.xlu0 %156
    %158 = vadd.xlane.f32.xlu0 %v155
    %v159 = vpop.xlane.xlu0 %158
    %v160 = vmax.f32 %v157, 1e-24
    %v161 = vmax.f32 %v159, 1e-24
    %v162 = vrsqrt.pop %v160
    %v163 = vrsqrt.pop %v161
    %v164 = vmul.f32 %v152, %v162
    %v165 = vmul.f32 %v153, %v163
    %v166 = vmax.f32 %v150, %v164
    %v167 = vmax.f32 %v151, %v165
    %v168 = vld [vmem:[#allocation10] sm:$0xff]
    %v169 = vld [vmem:[#allocation10 + $0x8] sm:$0xff]
    %v170 = vmul.f32 %v168, %v168
    %v171 = vmul.f32 %v169, %v169
    %172 = vadd.xlane.f32.xlu0 %v170
    %v173 = vpop.xlane.xlu0 %172
    %174 = vadd.xlane.f32.xlu0 %v171
    %v175 = vpop.xlane.xlu0 %174
    %v176 = vmax.f32 %v173, 1e-24
    %v177 = vmax.f32 %v175, 1e-24
    %v178 = vrsqrt.pop %v176
    %v179 = vrsqrt.pop %v177
    %v180 = vmul.f32 %v168, %v178
    %v181 = vmul.f32 %v169, %v179
    %v182 = vmax.f32 %v166, %v180
    %v183 = vmax.f32 %v167, %v181
    %v184 = vld [vmem:[#allocation11] sm:$0xff]
    %v185 = vld [vmem:[#allocation11 + $0x8] sm:$0xff]
    %v186 = vmul.f32 %v184, %v184
    %v187 = vmul.f32 %v185, %v185
    %188 = vadd.xlane.f32.xlu0 %v186
    %v189 = vpop.xlane.xlu0 %188
    %190 = vadd.xlane.f32.xlu0 %v187
    %v191 = vpop.xlane.xlu0 %190
    %v192 = vmax.f32 %v189, 1e-24
    %v193 = vmax.f32 %v191, 1e-24
    %v194 = vrsqrt.pop %v192
    %v195 = vrsqrt.pop %v193
    %v196 = vmul.f32 %v184, %v194
    %v197 = vmul.f32 %v185, %v195
    %v198 = vmax.f32 %v182, %v196
    %v199 = vmax.f32 %v183, %v197
    %200 = vst [vmem:[#allocation13] sm:$0xff] %v198
    %201 = vst [vmem:[#allocation13 + $0x8] sm:$0xff] %v199
    // Predicated region
    $region50: #{tpu_custom_call.1} parent=1 // pred_check
      _
    $region51: #{tpu_custom_call.1} parent=1 // pred_check_branch
      %203 = sbr.rel (0) target = $region53
    $region52: #{tpu_custom_call.1} parent=1 // pred_region
      %s205 = ssub.s32 256, 256
      %206 = vsyncadd [#allocation4], %s205
      %s207 = sshll.u32 [#allocation13], 4
      %s208 = int_to_ptr.vmem [resolvable:$true] %s207
      %213 = dma.vmem_to_hbm [thread:$0]  %s208, 256, %s6, [#allocation4], 128, 128, 8
    $region53: #{tpu_custom_call.1} parent=1 // pred_fallthru
      _
    // Predicated region
    $region54: #{tpu_custom_call.1} parent=1 // pred_check
      _
    $region55: #{tpu_custom_call.1} parent=1 // pred_check_branch
      %215 = sbr.rel (0) target = $region57
    $region56: #{tpu_custom_call.1} parent=1 // pred_region
      %216 = dma.done [#allocation4], 256
    $region57: #{tpu_custom_call.1} parent=1 // pred_fallthru
      _
    %217 = vsyncpa [#allocation3], 1
    %218 = vsyncpa [#allocation6], 1
    %219 = vsyncpa [#allocation9], 1
    %220 = vsyncpa [#allocation12], 1
    %221 = vsyncpa [#allocation4], 1

</llo_original>
